<compile_context>
chip_gen: v5e
topology: v5e:2x2
jax: 0.10.0
libtpu: 0.0.40
codegen_flags: <defaults>
</compile_context>

<pallas_src>
import jax
import jax.numpy as jnp
from jax import lax
from jax.experimental import pallas as pl
from jax.experimental.pallas import tpu as pltpu

LANES = 128


def _sublane_multiple(dtype) -> int:
    """Required sublane multiple for packed dtypes: 8 (32-bit), 16 (16-bit), 32 (8-bit)."""
    itemsize = jnp.dtype(dtype).itemsize
    return 8 * max(1, 4 // itemsize)


def _psnr_partial_kernel(rows: int, tile_rows: int, tiles0: int, need_mask: bool):
    """Per-core partial sum-of-squared-difference kernel.

    Grid is (num_cores, steps).  Core c processes tile indices t = c*tiles0 + i for
    i in [0, steps).  The (8, LANES) output block (one per core) is the accumulator.
    """
    groups = tile_rows // 8

    def kernel(a_ref, b_ref, o_ref):
        c = pl.program_id(0)
        i = pl.program_id(1)

        @pl.when(i == 0)
        def _():
            o_ref[...] = jnp.zeros_like(o_ref)

        d = a_ref[...].astype(jnp.float32) - b_ref[...].astype(jnp.float32)
        sq = d * d

        if need_mask:
            # Mask (a) garbage rows of the ragged last tile and (b) the duplicate tile
            # core 0 reads when the total tile count is odd (it belongs to core 1).
            t = c * tiles0 + i
            row = lax.broadcasted_iota(jnp.int32, sq.shape, 0)
            global_row = t * tile_rows + row
            limit = jnp.where(c == 0,
                              jnp.int32(tiles0 * tile_rows),
                              jnp.int32(rows))
            sq = jnp.where(global_row < limit, sq, jnp.float32(0.0))

        # Within-tile partial reduce: groups of native (8, 128) tiles are added
        # vreg-wise on the VPU -> accumulator stays a single (8, 128) block.
        o_ref[...] += sq.reshape(groups, 8, LANES).sum(axis=0)

    return kernel


def psnr(img1: jax.Array, img2: jax.Array, *, max_tile_rows: int = 8192) -> jax.Array:
    assert img1.shape == img2.shape, "img1/img2 must have identical shapes"
    assert max_tile_rows >= 8 and max_tile_rows % 8 == 0, \
        "max_tile_rows must be a positive multiple of 8"

    n = img1.size
    a = img1.reshape(-1)
    b = img2.reshape(-1)

    # Alignment so that the 2-D view has rows divisible by the packed-sublane count.
    sub = max(_sublane_multiple(img1.dtype), _sublane_multiple(img2.dtype))
    align = sub * LANES
    n_main = (n // align) * align

    if n_main == 0:
        # Input smaller than one aligned vreg-row group: plain JAX is optimal here.
        d = img1.astype(jnp.float32) - img2.astype(jnp.float32)
        return -10.0 * jnp.log10(jnp.mean(d * d))

    rows = n_main // LANES
    # Aligned case: pure reshape (no copy).  Misaligned: slice the aligned prefix only
    # (no padded copies of both inputs); the < sub*128-element tail is summed in JAX.
    a_main = a if n_main == n else a[:n_main]
    b_main = b if n_main == n else b[:n_main]
    a2 = a_main.reshape(rows, LANES)
    b2 = b_main.reshape(rows, LANES)

    tile_cap = max(sub, (max_tile_rows // sub) * sub)

    if rows <= tile_cap:
        # Small-input fast path: whole array is one block, single core, single step.
        num_cores, steps, tiles0 = 1, 1, 1
        tile_rows = rows
        need_mask = False
    else:
        # Multi-tile path sharded over 2 TensorCores (leading "parallel" axis).
        tile_rows = tile_cap
        total_tiles = pl.cdiv(rows, tile_rows)
        num_cores = 2
        tiles0 = total_tiles // 2          # core 0 owns tiles [0, tiles0)
        steps = total_tiles - tiles0       # core 1 owns tiles [tiles0, total_tiles)
        need_mask = (total_tiles % 2 != 0) or (rows % tile_rows != 0)

    partials = pl.pallas_call(
        _psnr_partial_kernel(rows, tile_rows, tiles0, need_mask),
        out_shape=jax.ShapeDtypeStruct((num_cores * 8, LANES), jnp.float32),
        grid_spec=pltpu.PrefetchScalarGridSpec(
            num_scalar_prefetch=0,
            grid=(num_cores, steps),
            in_specs=[
                pl.BlockSpec((tile_rows, LANES), lambda c, i: (c * tiles0 + i, 0)),
                pl.BlockSpec((tile_rows, LANES), lambda c, i: (c * tiles0 + i, 0)),
            ],
            out_specs=pl.BlockSpec((8, LANES), lambda c, i: (c, 0)),
        ),
        compiler_params=pltpu.CompilerParams(
            dimension_semantics=("parallel", "arbitrary"),
            vmem_limit_bytes=32 * 1024 * 1024,
        ),
    )(a2, b2)

    total_sq = jnp.sum(partials, dtype=jnp.float32)

    if n_main < n:
        # Tail (< sub*128 elements) handled in plain JAX and combined before log10.
        ta = a[n_main:].astype(jnp.float32)
        tb = b[n_main:].astype(jnp.float32)
        total_sq = total_sq + jnp.sum((ta - tb) ** 2, dtype=jnp.float32)

    mse = total_sq / jnp.float32(n)
    return -10.0 * jnp.log10(mse)


if __name__ == "__main__":
    key = jax.random.PRNGKey(0)
    k1, k2, k3, k4, k5, k6 = jax.random.split(key, 6)

    def ref_psnr(x, y):
        d = x.astype(jnp.float32) - y.astype(jnp.float32)
        return -10.0 * jnp.log10(jnp.mean(d * d))

    # Small NCHW input (matches the PyTorch module's typical usage) — single-block path.
    x = jax.random.uniform(k1, (2, 4, 16, 16), dtype=jnp.float32)
    y = jax.random.uniform(k2, (2, 4, 16, 16), dtype=jnp.float32)
    out = jax.block_until_ready(psnr(x, y))
    assert jnp.allclose(out, ref_psnr(x, y), rtol=1e-5, atol=1e-4), (out, ref_psnr(x, y))

    # Misaligned element count -> aligned-prefix kernel + plain-JAX tail path.
    xb = jax.random.uniform(k3, (3, 300, 1000), dtype=jnp.float32)
    yb = jax.random.uniform(k4, (3, 300, 1000), dtype=jnp.float32)
    outb = jax.block_until_ready(psnr(xb, yb))
    assert jnp.allclose(outb, ref_psnr(xb, yb), rtol=1e-5, atol=1e-4), (outb, ref_psnr(xb, yb))

    # Large input -> 2-core multi-tile path with odd tile count + ragged last tile.
    xc = jax.random.uniform(k5, (3, 3, 512, 512), dtype=jnp.float32)
    yc = jax.random.uniform(k6, (3, 3, 512, 512), dtype=jnp.float32)
    outc = jax.block_until_ready(psnr(xc, yc))
    assert jnp.allclose(outc, ref_psnr(xc, yc), rtol=1e-5, atol=1e-4), (outc, ref_psnr(xc, yc))

    print("KERNEL_OK")
</pallas_src>

<mosaic_0001>
module attributes {stable_mosaic.version = 11 : i64} {
  func.func @kernel(%arg0: i32, %arg1: i32, %arg2: memref<16x128xf32, #tpu.memory_space<vmem>>, %arg3: memref<16x128xf32, #tpu.memory_space<vmem>>, %arg4: memref<8x128xf32, #tpu.memory_space<vmem>>) attributes {dimension_semantics = [#tpu.dimension_semantics<parallel>, #tpu.dimension_semantics<arbitrary>], iteration_bounds = array<i64: 1, 1>, scalar_prefetch = 0 : i64, scratch_operands = 0 : i64, tpu.core_type = #tpu.core_type<tc>, window_params = [{transform_indices = @transform_0, window_bounds = array<i64: 16, 128>}, {transform_indices = @transform_1, window_bounds = array<i64: 16, 128>}, {transform_indices = @transform_2, window_bounds = array<i64: 8, 128>}]} {
    %c0_i32 = arith.constant 0 : i32
    %0 = arith.cmpi eq, %arg1, %c0_i32 : i32
    %1 = arith.extui %0 : i1 to i32
    %c0_i32_0 = arith.constant 0 : i32
    %2 = arith.cmpi ne, %1, %c0_i32_0 : i32
    scf.if %2 {
      %cst_8 = arith.constant 0.000000e+00 : f32
      %12 = vector.broadcast %cst_8 : f32 to vector<8x128xf32>
      %c0_9 = arith.constant 0 : index
      %c0_10 = arith.constant 0 : index
      %13 = vector.load %arg4[%c0_9, %c0_10] : memref<8x128xf32, #tpu.memory_space<vmem>>, vector<8x128xf32>
      tpu.vector_store %arg4[%c0_9, %c0_10], %12 {strides = array<i32>} : memref<8x128xf32, #tpu.memory_space<vmem>>, vector<8x128xf32>,
    } else {
    }
    %c0 = arith.constant 0 : index
    %c0_1 = arith.constant 0 : index
    %3 = vector.load %arg2[%c0, %c0_1] : memref<16x128xf32, #tpu.memory_space<vmem>>, vector<16x128xf32>
    %c0_2 = arith.constant 0 : index
    %c0_3 = arith.constant 0 : index
    %4 = vector.load %arg3[%c0_2, %c0_3] : memref<16x128xf32, #tpu.memory_space<vmem>>, vector<16x128xf32>
    %5 = arith.subf %3, %4 : vector<16x128xf32>
    %6 = arith.mulf %5, %5 : vector<16x128xf32>
    %c0_4 = arith.constant 0 : index
    %c0_5 = arith.constant 0 : index
    %7 = vector.load %arg4[%c0_4, %c0_5] : memref<8x128xf32, #tpu.memory_space<vmem>>, vector<8x128xf32>
    %8 = vector.shape_cast %6 : vector<16x128xf32> to vector<2x8x128xf32>
    %cst = arith.constant dense<0.000000e+00> : vector<8x128xf32>
    %9 = vector.multi_reduction <add>, %8, %cst [0] : vector<2x8x128xf32> to vector<8x128xf32>
    %10 = arith.addf %7, %9 : vector<8x128xf32>
    %c0_6 = arith.constant 0 : index
    %c0_7 = arith.constant 0 : index
    %11 = vector.load %arg4[%c0_6, %c0_7] : memref<8x128xf32, #tpu.memory_space<vmem>>, vector<8x128xf32>
    tpu.vector_store %arg4[%c0_6, %c0_7], %10 {strides = array<i32>} : memref<8x128xf32, #tpu.memory_space<vmem>>, vector<8x128xf32>,
    return
  }
  func.func @transform_0(%arg0: i32, %arg1: i32) -> (i32, i32) {
    %c1_i32 = arith.constant 1 : i32
    %0 = arith.muli %arg0, %c1_i32 : i32
    %1 = arith.addi %0, %arg1 : i32
    %c0_i32 = arith.constant 0 : i32
    %c0_i32_0 = arith.constant 0 : i32
    return %1, %c0_i32 : i32, i32
  }
  func.func @transform_1(%arg0: i32, %arg1: i32) -> (i32, i32) {
    %c1_i32 = arith.constant 1 : i32
    %0 = arith.muli %arg0, %c1_i32 : i32
    %1 = arith.addi %0, %arg1 : i32
    %c0_i32 = arith.constant 0 : i32
    %c0_i32_0 = arith.constant 0 : i32
    return %1, %c0_i32 : i32, i32
  }
  func.func @transform_2(%arg0: i32, %arg1: i32) -> (i32, i32) {
    %c0_i32 = arith.constant 0 : i32
    %c0_i32_0 = arith.constant 0 : i32
    return %arg0, %c0_i32 : i32, i32
  }
}

</mosaic_0001>

<llo_original>
// kernel: tpu_custom_call.1
$region0: #{tpu_custom_call.1}
  #allocation0 [shape = 'u32[]', space=smem, size = 0x4, offset = 0x4, fixed_abs, tag = 'smem constant byte address 0x4 - core index']
  #allocation1 [shape = 'u32[72,128]{1,0:T(1,128)}', space=vmem, size = 0x9000, scoped, tag = 'internal scratch']
  %s0 = inlined_call_operand.hbm [shape: f32[16,128], index: 0, kind: input, shape index: {}]
  %s1 = inlined_call_operand.hbm [shape: f32[16,128], index: 1, kind: input, shape index: {}]
  %s2 = inlined_call_operand.hbm [shape: f32[8,128], index: 2, kind: output, shape index: {}]
  %s3 = sld [smem:[#allocation0]]
  $region30: #{tpu_custom_call.1} parent=0
    _
  %s5 = ssub.s32 1, %s3
  %s6 = scalar_select 0, %s5, %s3
  $region1: #{tpu_custom_call.1} parent=0
    #allocation2 [shape = 'u8[8192]{0}', space=vmem, size = 0x2000, scoped, tag = 'input window, operand 0, single buffered']
    #allocation3 [shape = 's32[1]{0}', space=sflag, size = 0x4, scoped, tag = 'scoped memory for tpu_custom_call.1']
    #allocation4 [shape = 's32[1]{0}', space=sflag, size = 0x4, scoped, tag = 'scoped memory for tpu_custom_call.1']
    #allocation5 [shape = 'u8[8192]{0}', space=vmem, size = 0x2000, scoped, tag = 'input window, operand 1, single buffered']
    #allocation6 [shape = 's32[1]{0}', space=sflag, size = 0x4, scoped, tag = 'scoped memory for tpu_custom_call.1']
    #allocation7 [shape = 'u8[4096]{0}', space=vmem, size = 0x1000, scoped, tag = 'output window, operand 0, single buffered']
    %7 = vsyncpa [#allocation3], 0
    %8 = vsyncpa [#allocation6], 0
    %9 = vsyncpa [#allocation4], 0
    // Predicated region
    $region2: #{tpu_custom_call.1} parent=1 // pred_check
      _
    $region3: #{tpu_custom_call.1} parent=1 // pred_check_branch
      %11 = sbr.rel (0) target = $region5
    $region4: #{tpu_custom_call.1} parent=1 // pred_region
      %s12 = sadd.s32 0, 0
      %s13 = smul.u32 2, %s12
      %15 = vsyncadd [#allocation3], 0
      %s16 = smul.addr %s13, 8
      %s17 = scalar_lea.hbm %s0, %s16
      %s18 = sshll.u32 %s17, 4
      %s19 = int_to_ptr.hbm [resolvable:$true] %s18
      %s20 = sshll.u32 [#allocation2], 4
      %s21 = int_to_ptr.vmem [resolvable:$true] %s20
      %26 = dma.hbm_to_vmem [thread:$0]  %s19, 256, %s21, [#allocation3], 128, 128, 8
    $region5: #{tpu_custom_call.1} parent=1 // pred_fallthru
      _
    // Predicated region
    $region6: #{tpu_custom_call.1} parent=1 // pred_check
      _
    $region7: #{tpu_custom_call.1} parent=1 // pred_check_branch
      %28 = sbr.rel (0) target = $region9
    $region8: #{tpu_custom_call.1} parent=1 // pred_region
      %s29 = sadd.s32 0, 0
      %s30 = smul.u32 2, %s29
      %32 = vsyncadd [#allocation6], 0
      %s33 = smul.addr %s30, 8
      %s34 = scalar_lea.hbm %s1, %s33
      %s35 = sshll.u32 %s34, 4
      %s36 = int_to_ptr.hbm [resolvable:$true] %s35
      %s37 = sshll.u32 [#allocation5], 4
      %s38 = int_to_ptr.vmem [resolvable:$true] %s37
      %43 = dma.hbm_to_vmem [thread:$0]  %s36, 256, %s38, [#allocation6], 128, 128, 8
    $region9: #{tpu_custom_call.1} parent=1 // pred_fallthru
      _
    // Predicated region
    $region10: #{tpu_custom_call.1} parent=1 // pred_check
      _
    $region11: #{tpu_custom_call.1} parent=1 // pred_check_branch
      %45 = sbr.rel (0) target = $region13
    $region12: #{tpu_custom_call.1} parent=1 // pred_region
      %47 = dma.done [#allocation3], 256
    $region13: #{tpu_custom_call.1} parent=1 // pred_fallthru
      _
    // Predicated region
    $region14: #{tpu_custom_call.1} parent=1 // pred_check
      _
    $region15: #{tpu_custom_call.1} parent=1 // pred_check_branch
      %49 = sbr.rel (0) target = $region17
    $region16: #{tpu_custom_call.1} parent=1 // pred_region
      %51 = dma.done [#allocation6], 256
    $region17: #{tpu_custom_call.1} parent=1 // pred_fallthru
      _
    %s52 = sadd.s32 0, 0
    %s53 = smul.u32 2, %s52
    %s54 = sadd.s32 0, 0
    %s55 = smul.u32 2, %s54
    %p56 = scmp.eq.s32.totalorder 0, 0
    // Predicated region
    $region18: #{tpu_custom_call.1} parent=1 // pred_check
      %p57 = pneg %p56
    $region19: #{tpu_custom_call.1} parent=1 // pred_check_branch
      %59 = sbr.rel (%p57) target = $region21
    $region20: #{tpu_custom_call.1} parent=1 // pred_region
      %60 = vst [vmem:[#allocation7] sm:$0xff] 0.0
    $region21: #{tpu_custom_call.1} parent=1 // pred_fallthru
      _
    %v61 = vld [vmem:[#allocation2] sm:$0xff]
    %v62 = vld [vmem:[#allocation2 + $0x8] sm:$0xff]
    %v63 = vld [vmem:[#allocation5] sm:$0xff]
    %v64 = vld [vmem:[#allocation5 + $0x8] sm:$0xff]
    %v65 = vsub.f32 %v61, %v63
    %v66 = vsub.f32 %v62, %v64
    %v67 = vmul.f32 %v65, %v65
    %v68 = vmul.f32 %v66, %v66
    %v69 = vld [vmem:[#allocation7] sm:$0xff]
    %v70 = vadd.f32 %v67, %v68
    %v71 = vadd.f32 %v69, %v70
    %72 = vst [vmem:[#allocation7] sm:$0xff] %v71
    // Predicated region
    $region22: #{tpu_custom_call.1} parent=1 // pred_check
      _
    $region23: #{tpu_custom_call.1} parent=1 // pred_check_branch
      %74 = sbr.rel (0) target = $region25
    $region24: #{tpu_custom_call.1} parent=1 // pred_region
      %76 = vsyncadd [#allocation4], 0
      %s78 = sshll.u32 [#allocation7], 4
      %s79 = int_to_ptr.vmem [resolvable:$true] %s78
      %s80 = sshll.u32 %s2, 4
      %s81 = int_to_ptr.hbm [resolvable:$true] %s80
      %83 = dma.vmem_to_hbm [thread:$0]  %s79, 128, %s81, [#allocation4]
    $region25: #{tpu_custom_call.1} parent=1 // pred_fallthru
      _
    // Predicated region
    $region26: #{tpu_custom_call.1} parent=1 // pred_check
      _
    $region27: #{tpu_custom_call.1} parent=1 // pred_check_branch
      %85 = sbr.rel (0) target = $region29
    $region28: #{tpu_custom_call.1} parent=1 // pred_region
      %87 = dma.done [#allocation4], 128
    $region29: #{tpu_custom_call.1} parent=1 // pred_fallthru
      _
    %88 = vsyncpa [#allocation3], 1
    %89 = vsyncpa [#allocation6], 1
    %90 = vsyncpa [#allocation4], 1

</llo_original>
